<compile_context>
chip_gen: v7x
topology: tpu7x:2x2x1
jax: 0.10.0
libtpu: 0.0.40
codegen_flags: <defaults>
</compile_context>

<pallas_src>
import functools

import jax
import jax.numpy as jnp
from jax.experimental import pallas as pl
from jax.experimental.pallas import tpu as pltpu


def _remove_fn_loss_kernel(out0_ref, out1_ref, fnmask_ref,
                           loss_ref, sim_ref, *, temperature, batch):
    x0 = out0_ref[...].astype(jnp.float32)          # (Bp, D)
    x1 = out1_ref[...].astype(jnp.float32)          # (Bp, D)

    # L2 normalize along dim=1 (torch.nn.functional.normalize, eps=1e-12):
    # x / max(||x||, eps) == x * rsqrt(max(||x||^2, eps^2))  — single EUP op.
    n0 = x0 * jax.lax.rsqrt(
        jnp.maximum(jnp.sum(x0 * x0, axis=1, keepdims=True), 1e-24))
    n1 = x1 * jax.lax.rsqrt(
        jnp.maximum(jnp.sum(x1 * x1, axis=1, keepdims=True), 1e-24))

    # Single cross-modal matmul on the MXU; n1 @ n0.T is just its transpose.
    dims = (((1,), (1,)), ((), ()))
    s01 = jax.lax.dot_general(n0, n1, dims,
                              preferred_element_type=jnp.float32)   # (Bp, Bp)
    sim_ref[...] = s01                              # returned un-tempered, as in torch

    inv_t = 1.0 / temperature
    logits0 = s01 * inv_t                           # rows 0..B-1 of torch `logits`

    # Diagonal of both logit halves (they are equal) computed directly, O(B*D).
    diag = jnp.sum(n0 * n1, axis=1, keepdims=True) * inv_t          # (Bp, 1)

    fn = fnmask_ref[...] != 0                       # (Bp, Bp) bool from int8

    # One exp pass; E.T supplies exp(logits1) since logits1 == logits0.T.
    # TODO(synk): logits are unstabilized (max = 1/temperature), matching the
    # torch reference; subtract the row max before exp if temperature << 0.01.
    e = jnp.exp(logits0)                            # (Bp, Bp)  single EUP pass
    et = e.T                                        # XLU transpose, free-ish slot
    denom0 = jnp.sum(jnp.where(fn, e, 0.0), axis=1, keepdims=True)   # (Bp, 1)
    denom1 = jnp.sum(jnp.where(fn, et, 0.0), axis=1, keepdims=True)  # (Bp, 1)

    # Padded rows: wrapper sets fn[i, i] = 1 for i >= batch, and their
    # embeddings are zero, so diag == 0 and denom == exp(0) == 1 there
    # -> per_row == 0, no in-kernel validity masking needed.
    per_row = 2.0 * diag - jnp.log(denom0) - jnp.log(denom1)          # (Bp, 1)
    loss_ref[0, 0] = -jnp.sum(per_row) / (2.0 * batch)


def remove_fn_loss(out0, out1, indices, cosine_similarity_matrix, temperature):
    """Matches RemoveFNLoss.forward(out0, out1, indices)."""
    # Glue: gather labels by `indices` and build the false-negative mask (int8).
    labels = cosine_similarity_matrix[indices, :][:, indices]
    fn_mask = (labels == 0).astype(jnp.int8)

    B, D = out0.shape
    # Lane-dense padding: (B,B) tensors become (Bp,Bp) with Bp a multiple of 128
    # so every vector store is unmasked (full 128 lanes).
    Bp = max(128, ((B + 127) // 128) * 128)
    pad = Bp - B

    out0_p = jnp.pad(out0, ((0, pad), (0, 0)))
    out1_p = jnp.pad(out1, ((0, pad), (0, 0)))
    fn_p = jnp.pad(fn_mask, ((0, pad), (0, pad)))
    # Neutralize padded rows: put a 1 on their diagonal so denom == exp(0) == 1
    # (and diag == 0 because the padded embeddings are zero) -> zero contribution.
    fn_p = fn_p + jnp.diag((jnp.arange(Bp) >= B).astype(jnp.int8))

    kernel = functools.partial(
        _remove_fn_loss_kernel, temperature=float(temperature), batch=B)

    # TODO(synk): for large B (hundreds+), add a 128/256-aligned row-tile grid
    # with dimension_semantics=("parallel",) and a vmem_limit so the (Bp,Bp)
    # slabs stay within v7x's 64 MiB VMEM; at the tested tiny shapes the whole
    # padded problem (<1 MiB) fits in a single block.
    loss, sim01 = pl.pallas_call(
        kernel,
        out_shape=(jax.ShapeDtypeStruct((1, 1), jnp.float32),
                   jax.ShapeDtypeStruct((Bp, Bp), jnp.float32)),
        in_specs=[pl.BlockSpec(memory_space=pltpu.MemorySpace.VMEM)] * 3,
        out_specs=(pl.BlockSpec(memory_space=pltpu.MemorySpace.SMEM),
                   pl.BlockSpec(memory_space=pltpu.MemorySpace.VMEM)),
    )(out0_p, out1_p, fn_p)

    return loss[0, 0], sim01[:B, :B], jnp.arange(B)


def _reference(out0, out1, indices, csm, temperature):
    """Pure-JAX transcription of the torch forward, for verification."""
    n0 = out0 / jnp.maximum(jnp.linalg.norm(out0, axis=1, keepdims=True), 1e-12)
    n1 = out1 / jnp.maximum(jnp.linalg.norm(out1, axis=1, keepdims=True), 1e-12)
    labels = csm[indices, :][:, indices]
    logits = jnp.concatenate([n0 @ n1.T, n1 @ n0.T], axis=0) / temperature
    fn_mask = jnp.tile(labels == 0, (2, 1)).astype(jnp.float32)
    diag = jnp.concatenate([jnp.diagonal(n0 @ n1.T),
                            jnp.diagonal(n1 @ n0.T)]) / temperature
    log_prob = diag - jnp.log(jnp.sum(fn_mask * jnp.exp(logits), axis=1))
    return -jnp.mean(log_prob), n0 @ n1.T


if __name__ == "__main__":
    key = jax.random.PRNGKey(0)
    k0, k1, k2 = jax.random.split(key, 3)

    B, D, N = 8, 32, 16          # batch, embedding dim, dataset size
    temperature = 0.1
    threshold = 0.9

    # Deterministic stand-in for the torch.load'ed cosine-similarity matrix,
    # with the __init__ post-processing (threshold, zero diagonal).
    base = jax.random.normal(k2, (N, D), dtype=jnp.float32)
    base_n = base / jnp.linalg.norm(base, axis=1, keepdims=True)
    csm = base_n @ base_n.T
    csm = jnp.where(csm > threshold, csm, 0.0)
    csm = csm * (1.0 - jnp.eye(N, dtype=jnp.float32))

    out0 = jax.random.normal(k0, (B, D), dtype=jnp.float32)
    out1 = jax.random.normal(k1, (B, D), dtype=jnp.float32)
    indices = jnp.arange(B, dtype=jnp.int32)

    loss, sim01, label_ids = remove_fn_loss(out0, out1, indices, csm, temperature)
    jax.block_until_ready((loss, sim01, label_ids))

    ref_loss, ref_sim = _reference(out0, out1, indices, csm, temperature)
    assert jnp.allclose(loss, ref_loss, atol=1e-4, rtol=1e-4), (loss, ref_loss)
    assert jnp.allclose(sim01, ref_sim, atol=1e-5, rtol=1e-5)
    assert jnp.array_equal(label_ids, jnp.arange(B))

    print("KERNEL_OK")
</pallas_src>

<mosaic_0001>
module attributes {stable_mosaic.version = 11 : i64} {
  func.func @_remove_fn_loss_kernel(%arg0: memref<128x32xf32, #tpu.memory_space<vmem>>, %arg1: memref<128x32xf32, #tpu.memory_space<vmem>>, %arg2: memref<128x128xi8, #tpu.memory_space<vmem>>, %arg3: memref<1x1xf32, #tpu.memory_space<smem>>, %arg4: memref<128x128xf32, #tpu.memory_space<vmem>>) attributes {dimension_semantics = [], scalar_prefetch = 0 : i64, scratch_operands = 0 : i64, tpu.core_type = #tpu.core_type<tc>} {
    %c0 = arith.constant 0 : index
    %c0_0 = arith.constant 0 : index
    %0 = vector.load %arg0[%c0, %c0_0] : memref<128x32xf32, #tpu.memory_space<vmem>>, vector<128x32xf32>
    %c0_1 = arith.constant 0 : index
    %c0_2 = arith.constant 0 : index
    %1 = vector.load %arg1[%c0_1, %c0_2] : memref<128x32xf32, #tpu.memory_space<vmem>>, vector<128x32xf32>
    %2 = arith.mulf %0, %0 : vector<128x32xf32>
    %cst = arith.constant dense<0.000000e+00> : vector<128xf32>
    %3 = vector.multi_reduction <add>, %2, %cst [1] : vector<128x32xf32> to vector<128xf32>
    %4 = vector.shape_cast %3 : vector<128xf32> to vector<128x1xf32>
    %cst_3 = arith.constant 1.000000e-24 : f32
    %5 = vector.broadcast %cst_3 : f32 to vector<128x1xf32>
    %6 = arith.maximumf %4, %5 : vector<128x1xf32>
    %7 = math.rsqrt %6 : vector<128x1xf32>
    %8 = vector.broadcast %7 : vector<128x1xf32> to vector<128x32xf32>
    %9 = arith.mulf %0, %8 : vector<128x32xf32>
    %10 = arith.mulf %1, %1 : vector<128x32xf32>
    %cst_4 = arith.constant dense<0.000000e+00> : vector<128xf32>
    %11 = vector.multi_reduction <add>, %10, %cst_4 [1] : vector<128x32xf32> to vector<128xf32>
    %12 = vector.shape_cast %11 : vector<128xf32> to vector<128x1xf32>
    %cst_5 = arith.constant 1.000000e-24 : f32
    %13 = vector.broadcast %cst_5 : f32 to vector<128x1xf32>
    %14 = arith.maximumf %12, %13 : vector<128x1xf32>
    %15 = math.rsqrt %14 : vector<128x1xf32>
    %16 = vector.broadcast %15 : vector<128x1xf32> to vector<128x32xf32>
    %17 = arith.mulf %1, %16 : vector<128x32xf32>
    %cst_6 = arith.constant dense<0.000000e+00> : vector<128x128xf32>
    %18 = tpu.matmul %9, %17, %cst_6 {dimension_numbers = #tpu.dot_dimension_numbers<[1], [1], [0], [0], [0, 0, 1, 0], [], []>} : vector<128x32xf32>, vector<128x32xf32>, vector<128x128xf32> -> vector<128x128xf32>
    %c0_7 = arith.constant 0 : index
    %c0_8 = arith.constant 0 : index
    %19 = vector.load %arg4[%c0_7, %c0_8] : memref<128x128xf32, #tpu.memory_space<vmem>>, vector<128x128xf32>
    tpu.vector_store %arg4[%c0_7, %c0_8], %18 {strides = array<i32>} : memref<128x128xf32, #tpu.memory_space<vmem>>, vector<128x128xf32>,
    %cst_9 = arith.constant 1.000000e+01 : f32
    %20 = vector.broadcast %cst_9 : f32 to vector<128x128xf32>
    %21 = arith.mulf %18, %20 : vector<128x128xf32>
    %22 = arith.mulf %9, %17 : vector<128x32xf32>
    %cst_10 = arith.constant dense<0.000000e+00> : vector<128xf32>
    %23 = vector.multi_reduction <add>, %22, %cst_10 [1] : vector<128x32xf32> to vector<128xf32>
    %24 = vector.shape_cast %23 : vector<128xf32> to vector<128x1xf32>
    %cst_11 = arith.constant 1.000000e+01 : f32
    %25 = vector.broadcast %cst_11 : f32 to vector<128x1xf32>
    %26 = arith.mulf %24, %25 : vector<128x1xf32>
    %c0_12 = arith.constant 0 : index
    %c0_13 = arith.constant 0 : index
    %27 = vector.load %arg2[%c0_12, %c0_13] : memref<128x128xi8, #tpu.memory_space<vmem>>, vector<128x128xi8>
    %c0_i8 = arith.constant 0 : i8
    %28 = vector.broadcast %c0_i8 : i8 to vector<128x128xi8>
    %29 = arith.cmpi ne, %27, %28 : vector<128x128xi8>
    %30 = math.exp %21 : vector<128x128xf32>
    %31 = tpu.transpose %30, [1, 0] : vector<128x128xf32> -> vector<128x128xf32>
    %cst_14 = arith.constant 0.000000e+00 : f32
    %32 = vector.broadcast %cst_14 : f32 to vector<128x128xf32>
    %33 = arith.select %29, %30, %32 : vector<128x128xi1>, vector<128x128xf32>
    %cst_15 = arith.constant dense<0.000000e+00> : vector<128xf32>
    %34 = vector.multi_reduction <add>, %33, %cst_15 [1] : vector<128x128xf32> to vector<128xf32>
    %35 = vector.shape_cast %34 : vector<128xf32> to vector<128x1xf32>
    %cst_16 = arith.constant 0.000000e+00 : f32
    %36 = vector.broadcast %cst_16 : f32 to vector<128x128xf32>
    %37 = arith.select %29, %31, %36 : vector<128x128xi1>, vector<128x128xf32>
    %cst_17 = arith.constant dense<0.000000e+00> : vector<128xf32>
    %38 = vector.multi_reduction <add>, %37, %cst_17 [1] : vector<128x128xf32> to vector<128xf32>
    %39 = vector.shape_cast %38 : vector<128xf32> to vector<128x1xf32>
    %cst_18 = arith.constant 2.000000e+00 : f32
    %40 = vector.broadcast %cst_18 : f32 to vector<128x1xf32>
    %41 = arith.mulf %40, %26 : vector<128x1xf32>
    %42 = math.log %35 : vector<128x1xf32>
    %43 = arith.subf %41, %42 : vector<128x1xf32>
    %44 = math.log %39 : vector<128x1xf32>
    %45 = arith.subf %43, %44 : vector<128x1xf32>
    %46 = vector.shape_cast %45 : vector<128x1xf32> to vector<1x128x1xf32>
    %cst_19 = arith.constant dense<0.000000e+00> : vector<1xf32>
    %47 = vector.multi_reduction <add>, %46, %cst_19 [1, 2] : vector<1x128x1xf32> to vector<1xf32>
    %48 = vector.shape_cast %47 : vector<1xf32> to vector<1x1x1xf32>
    %49 = vector.extract %48[0, 0, 0] : f32 from vector<1x1x1xf32>
    %cst_20 = arith.constant 0.000000e+00 : f32
    %50 = arith.subf %cst_20, %49 : f32
    %cst_21 = arith.constant 1.600000e+01 : f32
    %51 = arith.divf %50, %cst_21 : f32
    %c0_22 = arith.constant 0 : index
    %c0_23 = arith.constant 0 : index
    %52 = memref.load %arg3[%c0_22, %c0_23] : memref<1x1xf32, #tpu.memory_space<smem>>
    memref.store %51, %arg3[%c0_22, %c0_23] : memref<1x1xf32, #tpu.memory_space<smem>>
    return
  }
}

</mosaic_0001>

<llo_original>
// kernel: tpu_custom_call.1
$region0: #{tpu_custom_call.1}
  #allocation0 [shape = 'u32[]', space=smem, size = 0x4, offset = 0x4, fixed_abs, tag = 'smem constant byte address 0x4 - core index']
  #allocation1 [shape = 'u32[144,128]{1,0:T(1,128)}', space=vmem, size = 0x12000, scoped, tag = 'internal scratch']
  %s0 = inlined_call_operand.vmem [shape: f32[128,32], index: 0, kind: input, shape index: {}]
  %s1 = inlined_call_operand.vmem [shape: f32[128,32], index: 1, kind: input, shape index: {}]
  %s2 = inlined_call_operand.vmem [shape: s8[128,128], index: 2, kind: input, shape index: {}]
  %s3 = inlined_call_operand.hbm [shape: f32[1,1], index: 3, kind: output, shape index: {0}]
  %s4 = inlined_call_operand.hbm [shape: f32[128,128], index: 4, kind: output, shape index: {1}]
  %5 = xla_tuple %s3, %s4
  %s6 = sld [smem:[#allocation0]]
  $region30: #{tpu_custom_call.1} parent=0
    _
  %s8 = ssub.s32 1, %s6
  %s9 = scalar_select 0, %s8, %s6
  $region1: #{tpu_custom_call.1} parent=0
    #allocation2 [shape = 'u8[512]{0}', space=smem, size = 0x200, scoped, tag = 'output window, operand 0, single buffered']
    #allocation3 [shape = 's32[1]{0}', space=sflag, size = 0x4, scoped, tag = 'scoped memory for tpu_custom_call.1']
    #allocation4 [shape = 's32[1]{0}', space=sflag, size = 0x4, scoped, tag = 'scoped memory for tpu_custom_call.1']
    #allocation5 [shape = 'u8[65536]{0}', space=vmem, size = 0x10000, scoped, tag = 'output window, operand 1, single buffered']
    %10 = vsyncpa [#allocation4], 0
    %11 = vsyncpa [#allocation3], 0
    // Predicated region
    $region2: #{tpu_custom_call.1} parent=1 // pred_check
      _
    $region3: #{tpu_custom_call.1} parent=1 // pred_check_branch
      %13 = sbr.rel (0) target = $region5
    $region4: #{tpu_custom_call.1} parent=1 // pred_region
      _
    $region5: #{tpu_custom_call.1} parent=1 // pred_fallthru
      _
    // Predicated region
    $region6: #{tpu_custom_call.1} parent=1 // pred_check
      _
    $region7: #{tpu_custom_call.1} parent=1 // pred_check_branch
      %15 = sbr.rel (0) target = $region9
    $region8: #{tpu_custom_call.1} parent=1 // pred_region
      _
    $region9: #{tpu_custom_call.1} parent=1 // pred_fallthru
      _
    // Predicated region
    $region10: #{tpu_custom_call.1} parent=1 // pred_check
      _
    $region11: #{tpu_custom_call.1} parent=1 // pred_check_branch
      %17 = sbr.rel (0) target = $region13
    $region12: #{tpu_custom_call.1} parent=1 // pred_region
      _
    $region13: #{tpu_custom_call.1} parent=1 // pred_fallthru
      _
    %v20 = vld [vmem:[%s0] sm:$0xff]
    %v21 = vld [vmem:[%s0 + $0x8] sm:$0xff]
    %v22 = vld [vmem:[%s0 + $0x10] sm:$0xff]
    %v23 = vld [vmem:[%s0 + $0x18] sm:$0xff]
    %v24 = vld [vmem:[%s0 + $0x20] sm:$0xff]
    %v25 = vld [vmem:[%s0 + $0x28] sm:$0xff]
    %v26 = vld [vmem:[%s0 + $0x30] sm:$0xff]
    %v27 = vld [vmem:[%s0 + $0x38] sm:$0xff]
    %v28 = vld [vmem:[%s0 + $0x40] sm:$0xff]
    %v29 = vld [vmem:[%s0 + $0x48] sm:$0xff]
    %v30 = vld [vmem:[%s0 + $0x50] sm:$0xff]
    %v31 = vld [vmem:[%s0 + $0x58] sm:$0xff]
    %v32 = vld [vmem:[%s0 + $0x60] sm:$0xff]
    %v33 = vld [vmem:[%s0 + $0x68] sm:$0xff]
    %v34 = vld [vmem:[%s0 + $0x70] sm:$0xff]
    %v35 = vld [vmem:[%s0 + $0x78] sm:$0xff]
    %v36 = vld [vmem:[%s1] sm:$0xff]
    %v37 = vld [vmem:[%s1 + $0x8] sm:$0xff]
    %v38 = vld [vmem:[%s1 + $0x10] sm:$0xff]
    %v39 = vld [vmem:[%s1 + $0x18] sm:$0xff]
    %v40 = vld [vmem:[%s1 + $0x20] sm:$0xff]
    %v41 = vld [vmem:[%s1 + $0x28] sm:$0xff]
    %v42 = vld [vmem:[%s1 + $0x30] sm:$0xff]
    %v43 = vld [vmem:[%s1 + $0x38] sm:$0xff]
    %v44 = vld [vmem:[%s1 + $0x40] sm:$0xff]
    %v45 = vld [vmem:[%s1 + $0x48] sm:$0xff]
    %v46 = vld [vmem:[%s1 + $0x50] sm:$0xff]
    %v47 = vld [vmem:[%s1 + $0x58] sm:$0xff]
    %v48 = vld [vmem:[%s1 + $0x60] sm:$0xff]
    %v49 = vld [vmem:[%s1 + $0x68] sm:$0xff]
    %v50 = vld [vmem:[%s1 + $0x70] sm:$0xff]
    %v51 = vld [vmem:[%s1 + $0x78] sm:$0xff]
    %v52 = vmul.f32 %v20, %v20
    %v53 = vmul.f32 %v21, %v21
    %v54 = vmul.f32 %v22, %v22
    %v55 = vmul.f32 %v23, %v23
    %v56 = vmul.f32 %v24, %v24
    %v57 = vmul.f32 %v25, %v25
    %v58 = vmul.f32 %v26, %v26
    %v59 = vmul.f32 %v27, %v27
    %v60 = vmul.f32 %v28, %v28
    %v61 = vmul.f32 %v29, %v29
    %v62 = vmul.f32 %v30, %v30
    %v63 = vmul.f32 %v31, %v31
    %v64 = vmul.f32 %v32, %v32
    %v65 = vmul.f32 %v33, %v33
    %v66 = vmul.f32 %v34, %v34
    %v67 = vmul.f32 %v35, %v35
    %vm68 = vcmask 261120
    %v69 = vsel %vm68, %v52, 0.0
    %70 = vadd.xlane.f32.xlu0 %v69
    %v71 = vpop.xlane.xlu0 %70
    %v72 = vsel %vm68, %v53, 0.0
    %73 = vadd.xlane.f32.xlu0 %v72
    %v74 = vpop.xlane.xlu0 %73
    %v75 = vsel %vm68, %v54, 0.0
    %76 = vadd.xlane.f32.xlu0 %v75
    %v77 = vpop.xlane.xlu0 %76
    %v78 = vsel %vm68, %v55, 0.0
    %79 = vadd.xlane.f32.xlu0 %v78
    %v80 = vpop.xlane.xlu0 %79
    %v81 = vsel %vm68, %v56, 0.0
    %82 = vadd.xlane.f32.xlu0 %v81
    %v83 = vpop.xlane.xlu0 %82
    %v84 = vsel %vm68, %v57, 0.0
    %85 = vadd.xlane.f32.xlu0 %v84
    %v86 = vpop.xlane.xlu0 %85
    %v87 = vsel %vm68, %v58, 0.0
    %88 = vadd.xlane.f32.xlu0 %v87
    %v89 = vpop.xlane.xlu0 %88
    %v90 = vsel %vm68, %v59, 0.0
    %91 = vadd.xlane.f32.xlu0 %v90
    %v92 = vpop.xlane.xlu0 %91
    %v93 = vsel %vm68, %v60, 0.0
    %94 = vadd.xlane.f32.xlu0 %v93
    %v95 = vpop.xlane.xlu0 %94
    %v96 = vsel %vm68, %v61, 0.0
    %97 = vadd.xlane.f32.xlu0 %v96
    %v98 = vpop.xlane.xlu0 %97
    %v99 = vsel %vm68, %v62, 0.0
    %100 = vadd.xlane.f32.xlu0 %v99
    %v101 = vpop.xlane.xlu0 %100
    %v102 = vsel %vm68, %v63, 0.0
    %103 = vadd.xlane.f32.xlu0 %v102
    %v104 = vpop.xlane.xlu0 %103
    %v105 = vsel %vm68, %v64, 0.0
    %106 = vadd.xlane.f32.xlu0 %v105
    %v107 = vpop.xlane.xlu0 %106
    %v108 = vsel %vm68, %v65, 0.0
    %109 = vadd.xlane.f32.xlu0 %v108
    %v110 = vpop.xlane.xlu0 %109
    %v111 = vsel %vm68, %v66, 0.0
    %112 = vadd.xlane.f32.xlu0 %v111
    %v113 = vpop.xlane.xlu0 %112
    %v114 = vsel %vm68, %v67, 0.0
    %115 = vadd.xlane.f32.xlu0 %v114
    %v116 = vpop.xlane.xlu0 %115
    %v117 = vmax.f32 %v71, 1e-24
    %v118 = vmax.f32 %v74, 1e-24
    %v119 = vmax.f32 %v77, 1e-24
    %v120 = vmax.f32 %v80, 1e-24
    %v121 = vmax.f32 %v83, 1e-24
    %v122 = vmax.f32 %v86, 1e-24
    %v123 = vmax.f32 %v89, 1e-24
    %v124 = vmax.f32 %v92, 1e-24
    %v125 = vmax.f32 %v95, 1e-24
    %v126 = vmax.f32 %v98, 1e-24
    %v127 = vmax.f32 %v101, 1e-24
    %v128 = vmax.f32 %v104, 1e-24
    %v129 = vmax.f32 %v107, 1e-24
    %v130 = vmax.f32 %v110, 1e-24
    %v131 = vmax.f32 %v113, 1e-24
    %v132 = vmax.f32 %v116, 1e-24
    %v133 = vrsqrt.pop %v117
    %v134 = vrsqrt.pop %v118
    %v135 = vrsqrt.pop %v119
    %v136 = vrsqrt.pop %v120
    %v137 = vrsqrt.pop %v121
    %v138 = vrsqrt.pop %v122
    %v139 = vrsqrt.pop %v123
    %v140 = vrsqrt.pop %v124
    %v141 = vrsqrt.pop %v125
    %v142 = vrsqrt.pop %v126
    %v143 = vrsqrt.pop %v127
    %v144 = vrsqrt.pop %v128
    %v145 = vrsqrt.pop %v129
    %v146 = vrsqrt.pop %v130
    %v147 = vrsqrt.pop %v131
    %v148 = vrsqrt.pop %v132
    %v149 = vmul.f32 %v20, %v133
    %v150 = vmul.f32 %v21, %v134
    %v151 = vmul.f32 %v22, %v135
    %v152 = vmul.f32 %v23, %v136
    %v153 = vmul.f32 %v24, %v137
    %v154 = vmul.f32 %v25, %v138
    %v155 = vmul.f32 %v26, %v139
    %v156 = vmul.f32 %v27, %v140
    %v157 = vmul.f32 %v28, %v141
    %v158 = vmul.f32 %v29, %v142
    %v159 = vmul.f32 %v30, %v143
    %v160 = vmul.f32 %v31, %v144
    %v161 = vmul.f32 %v32, %v145
    %v162 = vmul.f32 %v33, %v146
    %v163 = vmul.f32 %v34, %v147
    %v164 = vmul.f32 %v35, %v148
    %v165 = vmul.f32 %v36, %v36
    %v166 = vmul.f32 %v37, %v37
    %v167 = vmul.f32 %v38, %v38
    %v168 = vmul.f32 %v39, %v39
    %v169 = vmul.f32 %v40, %v40
    %v170 = vmul.f32 %v41, %v41
    %v171 = vmul.f32 %v42, %v42
    %v172 = vmul.f32 %v43, %v43
    %v173 = vmul.f32 %v44, %v44
    %v174 = vmul.f32 %v45, %v45
    %v175 = vmul.f32 %v46, %v46
    %v176 = vmul.f32 %v47, %v47
    %v177 = vmul.f32 %v48, %v48
    %v178 = vmul.f32 %v49, %v49
    %v179 = vmul.f32 %v50, %v50
    %v180 = vmul.f32 %v51, %v51
    %v181 = vsel %vm68, %v165, 0.0
    %182 = vadd.xlane.f32.xlu0 %v181
    %v183 = vpop.xlane.xlu0 %182
    %v184 = vsel %vm68, %v166, 0.0
    %185 = vadd.xlane.f32.xlu0 %v184
    %v186 = vpop.xlane.xlu0 %185
    %v187 = vsel %vm68, %v167, 0.0
    %188 = vadd.xlane.f32.xlu0 %v187
    %v189 = vpop.xlane.xlu0 %188
    %v190 = vsel %vm68, %v168, 0.0
    %191 = vadd.xlane.f32.xlu0 %v190
    %v192 = vpop.xlane.xlu0 %191
    %v193 = vsel %vm68, %v169, 0.0
    %194 = vadd.xlane.f32.xlu0 %v193
    %v195 = vpop.xlane.xlu0 %194
    %v196 = vsel %vm68, %v170, 0.0
    %197 = vadd.xlane.f32.xlu0 %v196
    %v198 = vpop.xlane.xlu0 %197
    %v199 = vsel %vm68, %v171, 0.0
    %200 = vadd.xlane.f32.xlu0 %v199
    %v201 = vpop.xlane.xlu0 %200
    %v202 = vsel %vm68, %v172, 0.0
    %203 = vadd.xlane.f32.xlu0 %v202
    %v204 = vpop.xlane.xlu0 %203
    %v205 = vsel %vm68, %v173, 0.0
    %206 = vadd.xlane.f32.xlu0 %v205
    %v207 = vpop.xlane.xlu0 %206
    %v208 = vsel %vm68, %v174, 0.0
    %209 = vadd.xlane.f32.xlu0 %v208
    %v210 = vpop.xlane.xlu0 %209
    %v211 = vsel %vm68, %v175, 0.0
    %212 = vadd.xlane.f32.xlu0 %v211
    %v213 = vpop.xlane.xlu0 %212
    %v214 = vsel %vm68, %v176, 0.0
    %215 = vadd.xlane.f32.xlu0 %v214
    %v216 = vpop.xlane.xlu0 %215
    %v217 = vsel %vm68, %v177, 0.0
    %218 = vadd.xlane.f32.xlu0 %v217
    %v219 = vpop.xlane.xlu0 %218
    %v220 = vsel %vm68, %v178, 0.0
    %221 = vadd.xlane.f32.xlu0 %v220
    %v222 = vpop.xlane.xlu0 %221
    %v223 = vsel %vm68, %v179, 0.0
    %224 = vadd.xlane.f32.xlu0 %v223
    %v225 = vpop.xlane.xlu0 %224
    %v226 = vsel %vm68, %v180, 0.0
    %227 = vadd.xlane.f32.xlu0 %v226
    %v228 = vpop.xlane.xlu0 %227
    %v229 = vmax.f32 %v183, 1e-24
    %v230 = vmax.f32 %v186, 1e-24
    %v231 = vmax.f32 %v189, 1e-24
    %v232 = vmax.f32 %v192, 1e-24
    %v233 = vmax.f32 %v195, 1e-24
    %v234 = vmax.f32 %v198, 1e-24
    %v235 = vmax.f32 %v201, 1e-24
    %v236 = vmax.f32 %v204, 1e-24
    %v237 = vmax.f32 %v207, 1e-24
    %v238 = vmax.f32 %v210, 1e-24
    %v239 = vmax.f32 %v213, 1e-24
    %v240 = vmax.f32 %v216, 1e-24
    %v241 = vmax.f32 %v219, 1e-24
    %v242 = vmax.f32 %v222, 1e-24
    %v243 = vmax.f32 %v225, 1e-24
    %v244 = vmax.f32 %v228, 1e-24
    %v245 = vrsqrt.pop %v229
    %v246 = vrsqrt.pop %v230
    %v247 = vrsqrt.pop %v231
    %v248 = vrsqrt.pop %v232
    %v249 = vrsqrt.pop %v233
    %v250 = vrsqrt.pop %v234
    %v251 = vrsqrt.pop %v235
    %v252 = vrsqrt.pop %v236
    %v253 = vrsqrt.pop %v237
    %v254 = vrsqrt.pop %v238
    %v255 = vrsqrt.pop %v239
    %v256 = vrsqrt.pop %v240
    %v257 = vrsqrt.pop %v241
    %v258 = vrsqrt.pop %v242
    %v259 = vrsqrt.pop %v243
    %v260 = vrsqrt.pop %v244
    %v261 = vmul.f32 %v36, %v245
    %v262 = vmul.f32 %v37, %v246
    %v263 = vmul.f32 %v38, %v247
    %v264 = vmul.f32 %v39, %v248
    %v265 = vmul.f32 %v40, %v249
    %v266 = vmul.f32 %v41, %v250
    %v267 = vmul.f32 %v42, %v251
    %v268 = vmul.f32 %v43, %v252
    %v269 = vmul.f32 %v44, %v253
    %v270 = vmul.f32 %v45, %v254
    %v271 = vmul.f32 %v46, %v255
    %v272 = vmul.f32 %v47, %v256
    %v273 = vmul.f32 %v48, %v257
    %v274 = vmul.f32 %v49, %v258
    %v275 = vmul.f32 %v50, %v259
    %v276 = vmul.f32 %v51, %v260
    %v278 = vsel %vm68, %v149, 0
    %v281 = vsel %vm68, %v150, 0
    %v284 = vsel %vm68, %v151, 0
    %v287 = vsel %vm68, %v152, 0
    %v290 = vsel %vm68, %v153, 0
    %v293 = vsel %vm68, %v154, 0
    %v296 = vsel %vm68, %v155, 0
    %v299 = vsel %vm68, %v156, 0
    %v302 = vsel %vm68, %v157, 0
    %v305 = vsel %vm68, %v158, 0
    %v308 = vsel %vm68, %v159, 0
    %v311 = vsel %vm68, %v160, 0
    %v314 = vsel %vm68, %v161, 0
    %v317 = vsel %vm68, %v162, 0
    %v320 = vsel %vm68, %v163, 0
    %v323 = vsel %vm68, %v164, 0
    %v326 = vsel %vm68, %v261, 0
    %v329 = vsel %vm68, %v262, 0
    %v332 = vsel %vm68, %v263, 0
    %v335 = vsel %vm68, %v264, 0
    %v338 = vsel %vm68, %v265, 0
    %v341 = vsel %vm68, %v266, 0
    %v344 = vsel %vm68, %v267, 0
    %v347 = vsel %vm68, %v268, 0
    %v350 = vsel %vm68, %v269, 0
    %v353 = vsel %vm68, %v270, 0
    %v356 = vsel %vm68, %v271, 0
    %v359 = vsel %vm68, %v272, 0
    %v362 = vsel %vm68, %v273, 0
    %v365 = vsel %vm68, %v274, 0
    %v368 = vsel %vm68, %v275, 0
    %v371 = vsel %vm68, %v276, 0
    %373 = vmatprep.subr.mxu0 0.0
    %374 = vmatpush1.xpose.msra.mxu0 %v326
    %375 = vmatprep.subr.mxu0 0.0
    %376 = vmatpush1.xpose.msra.mxu0 %v329
    %377 = vmatprep.subr.mxu0 0.0
    %378 = vmatpush1.xpose.msra.mxu0 %v332
    %379 = vmatprep.subr.mxu0 0.0
    %380 = vmatpush1.xpose.msra.mxu0 %v335
    %381 = vmatprep.subr.mxu0 0.0
    %382 = vmatpush1.xpose.msra.mxu0 %v338
    %383 = vmatprep.subr.mxu0 0.0
    %384 = vmatpush1.xpose.msra.mxu0 %v341
    %385 = vmatprep.subr.mxu0 0.0
    %386 = vmatpush1.xpose.msra.mxu0 %v344
    %387 = vmatprep.subr.mxu0 0.0
    %388 = vmatpush1.xpose.msra.mxu0 %v347
    %389 = vmatprep.subr.mxu0 0.0
    %390 = vmatpush1.xpose.msra.mxu0 %v350
    %391 = vmatprep.subr.mxu0 0.0
    %392 = vmatpush1.xpose.msra.mxu0 %v353
    %393 = vmatprep.subr.mxu0 0.0
    %394 = vmatpush1.xpose.msra.mxu0 %v356
    %395 = vmatprep.subr.mxu0 0.0
    %396 = vmatpush1.xpose.msra.mxu0 %v359
    %397 = vmatprep.subr.mxu0 0.0
    %398 = vmatpush1.xpose.msra.mxu0 %v362
    %399 = vmatprep.subr.mxu0 0.0
    %400 = vmatpush1.xpose.msra.mxu0 %v365
    %401 = vmatprep.subr.mxu0 0.0
    %402 = vmatpush1.xpose.msra.mxu0 %v368
    %403 = vmatprep.subr.mxu0 0.0
    %404 = vmatpush1.xpose.msra.mxu0 %v371
    %405 = vmatprep.subr.mxu0 0.0
    %406 = vmatpush1.xpose.msra.mxu0 0.0
    %407 = vmatprep.subr.mxu0 0.0
    %408 = vmatpush1.xpose.msra.mxu0 0.0
    %409 = vmatprep.subr.mxu0 0.0
    %410 = vmatpush1.xpose.msra.mxu0 0.0
    %411 = vmatprep.subr.mxu0 0.0
    %412 = vmatpush1.xpose.msra.mxu0 0.0
    %413 = vmatprep.subr.mxu0 0.0
    %414 = vmatpush1.xpose.msra.mxu0 0.0
    %415 = vmatprep.subr.mxu0 0.0
    %416 = vmatpush1.xpose.msra.mxu0 0.0
    %417 = vmatprep.subr.mxu0 0.0
    %418 = vmatpush1.xpose.msra.mxu0 0.0
    %419 = vmatprep.subr.mxu0 0.0
    %420 = vmatpush1.xpose.msra.mxu0 0.0
    %421 = vmatprep.subr.mxu0 0.0
    %422 = vmatpush1.xpose.msra.mxu0 0.0
    %423 = vmatprep.subr.mxu0 0.0
    %424 = vmatpush1.xpose.msra.mxu0 0.0
    %425 = vmatprep.subr.mxu0 0.0
    %426 = vmatpush1.xpose.msra.mxu0 0.0
    %427 = vmatprep.subr.mxu0 0.0
    %428 = vmatpush1.xpose.msra.mxu0 0.0
    %429 = vmatprep.subr.mxu0 0.0
    %430 = vmatpush1.xpose.msra.mxu0 0.0
    %431 = vmatprep.subr.mxu0 0.0
    %432 = vmatpush1.xpose.msra.mxu0 0.0
    %433 = vmatprep.subr.mxu0 0.0
    %434 = vmatpush1.xpose.msra.mxu0 0.0
    %435 = vmatprep.subr.mxu0 0.0
    %436 = vmatpush1.xpose.msra.mxu0 0.0
    %437 = vmatprep.mubr.f32.mxu0 0.0
    %438 = vmatmul.mubr.f32.gmra.mrb[0].mxu0 %v278
    %v439 = vpop.f32.mrb[0].mxu0
    %v440 = vadd.f32 0.0, %v439
    %v441 = vpop.f32.mrb[0].mxu0
    %442 = vmatprep.mubr.f32.mxu0 0.0
    %443 = vmatmul.mubr.f32.gmra.mrb[0].mxu0 %v281
    %v444 = vpop.f32.mrb[0].mxu0
    %v445 = vadd.f32 0.0, %v444
    %v446 = vpop.f32.mrb[0].mxu0
    %447 = vmatprep.mubr.f32.mxu0 0.0
    %448 = vmatmul.mubr.f32.gmra.mrb[0].mxu0 %v284
    %v449 = vpop.f32.mrb[0].mxu0
    %v450 = vadd.f32 0.0, %v449
    %v451 = vpop.f32.mrb[0].mxu0
    %452 = vmatprep.mubr.f32.mxu0 0.0
    %453 = vmatmul.mubr.f32.gmra.mrb[0].mxu0 %v287
    %v454 = vpop.f32.mrb[0].mxu0
    %v455 = vadd.f32 0.0, %v454
    %v456 = vpop.f32.mrb[0].mxu0
    %457 = vmatprep.mubr.f32.mxu0 0.0
    %458 = vmatmul.mubr.f32.gmra.mrb[0].mxu0 %v290
    %v459 = vpop.f32.mrb[0].mxu0
    %v460 = vadd.f32 0.0, %v459
    %v461 = vpop.f32.mrb[0].mxu0
    %462 = vmatprep.mubr.f32.mxu0 0.0
    %463 = vmatmul.mubr.f32.gmra.mrb[0].mxu0 %v293
    %v464 = vpop.f32.mrb[0].mxu0
    %v465 = vadd.f32 0.0, %v464
    %v466 = vpop.f32.mrb[0].mxu0
    %467 = vmatprep.mubr.f32.mxu0 0.0
    %468 = vmatmul.mubr.f32.gmra.mrb[0].mxu0 %v296
    %v469 = vpop.f32.mrb[0].mxu0
    %v470 = vadd.f32 0.0, %v469
    %v471 = vpop.f32.mrb[0].mxu0
    %472 = vmatprep.mubr.f32.mxu0 0.0
    %473 = vmatmul.mubr.f32.gmra.mrb[0].mxu0 %v299
    %v474 = vpop.f32.mrb[0].mxu0
    %v475 = vadd.f32 0.0, %v474
    %v476 = vpop.f32.mrb[0].mxu0
    %477 = vmatprep.mubr.f32.mxu0 0.0
    %478 = vmatmul.mubr.f32.gmra.mrb[0].mxu0 %v302
    %v479 = vpop.f32.mrb[0].mxu0
    %v480 = vadd.f32 0.0, %v479
    %v481 = vpop.f32.mrb[0].mxu0
    %482 = vmatprep.mubr.f32.mxu0 0.0
    %483 = vmatmul.mubr.f32.gmra.mrb[0].mxu0 %v305
    %v484 = vpop.f32.mrb[0].mxu0
    %v485 = vadd.f32 0.0, %v484
    %v486 = vpop.f32.mrb[0].mxu0
    %487 = vmatprep.mubr.f32.mxu0 0.0
    %488 = vmatmul.mubr.f32.gmra.mrb[0].mxu0 %v308
    %v489 = vpop.f32.mrb[0].mxu0
    %v490 = vadd.f32 0.0, %v489
    %v491 = vpop.f32.mrb[0].mxu0
    %492 = vmatprep.mubr.f32.mxu0 0.0
    %493 = vmatmul.mubr.f32.gmra.mrb[0].mxu0 %v311
    %v494 = vpop.f32.mrb[0].mxu0
    %v495 = vadd.f32 0.0, %v494
    %v496 = vpop.f32.mrb[0].mxu0
    %497 = vmatprep.mubr.f32.mxu0 0.0
    %498 = vmatmul.mubr.f32.gmra.mrb[0].mxu0 %v314
    %v499 = vpop.f32.mrb[0].mxu0
    %v500 = vadd.f32 0.0, %v499
    %v501 = vpop.f32.mrb[0].mxu0
    %502 = vmatprep.mubr.f32.mxu0 0.0
    %503 = vmatmul.mubr.f32.gmra.mrb[0].mxu0 %v317
    %v504 = vpop.f32.mrb[0].mxu0
    %v505 = vadd.f32 0.0, %v504
    %v506 = vpop.f32.mrb[0].mxu0
    %507 = vmatprep.mubr.f32.mxu0 0.0
    %508 = vmatmul.mubr.f32.gmra.mrb[0].mxu0 %v320
    %v509 = vpop.f32.mrb[0].mxu0
    %v510 = vadd.f32 0.0, %v509
    %v511 = vpop.f32.mrb[0].mxu0
    %512 = vmatprep.mubr.f32.mxu0 0.0
    %513 = vmatmul.mubr.f32.gmra.mrb[0].mxu0 %v323
    %v514 = vpop.f32.mrb[0].mxu0
    %v515 = vadd.f32 0.0, %v514
    %v516 = vpop.f32.mrb[0].mxu0
    %517 = vdwg.mxu0
    %518 = vst [vmem:[#allocation5] sm:$0xff] %v440
    %519 = vst [vmem:[#allocation5 + $0x8] sm:$0xff] %v445
    %520 = vst [vmem:[#allocation5 + $0x10] sm:$0xff] %v450
    %521 = vst [vmem:[#allocation5 + $0x18] sm:$0xff] %v455
    %522 = vst [vmem:[#allocation5 + $0x20] sm:$0xff] %v460
    %523 = vst [vmem:[#allocation5 + $0x28] sm:$0xff] %v465
    %524 = vst [vmem:[#allocation5 + $0x30] sm:$0xff] %v470
    %525 = vst [vmem:[#allocation5 + $0x38] sm:$0xff] %v475
    %526 = vst [vmem:[#allocation5 + $0x40] sm:$0xff] %v480
    %527 = vst [vmem:[#allocation5 + $0x48] sm:$0xff] %v485
    %528 = vst [vmem:[#allocation5 + $0x50] sm:$0xff] %v490
    %529 = vst [vmem:[#allocation5 + $0x58] sm:$0xff] %v495
    %530 = vst [vmem:[#allocation5 + $0x60] sm:$0xff] %v500
    %531 = vst [vmem:[#allocation5 + $0x68] sm:$0xff] %v505
    %532 = vst [vmem:[#allocation5 + $0x70] sm:$0xff] %v510
    %533 = vst [vmem:[#allocation5 + $0x78] sm:$0xff] %v515
    %v534 = vmul.f32 %v440, 10.0
    %v535 = vmul.f32 %v445, 10.0
    %v536 = vmul.f32 %v450, 10.0
    %v537 = vmul.f32 %v455, 10.0
    %v538 = vmul.f32 %v460, 10.0
    %v539 = vmul.f32 %v465, 10.0
    %v540 = vmul.f32 %v470, 10.0
    %v541 = vmul.f32 %v475, 10.0
    %v542 = vmul.f32 %v480, 10.0
    %v543 = vmul.f32 %v485, 10.0
    %v544 = vmul.f32 %v490, 10.0
    %v545 = vmul.f32 %v495, 10.0
    %v546 = vmul.f32 %v500, 10.0
    %v547 = vmul.f32 %v505, 10.0
    %v548 = vmul.f32 %v510, 10.0
    %v549 = vmul.f32 %v515, 10.0
    %v550 = vmul.f32 %v149, %v261
    %v551 = vmul.f32 %v150, %v262
    %v552 = vmul.f32 %v151, %v263
    %v553 = vmul.f32 %v152, %v264
    %v554 = vmul.f32 %v153, %v265
    %v555 = vmul.f32 %v154, %v266
    %v556 = vmul.f32 %v155, %v267
    %v557 = vmul.f32 %v156, %v268
    %v558 = vmul.f32 %v157, %v269
    %v559 = vmul.f32 %v158, %v270
    %v560 = vmul.f32 %v159, %v271
    %v561 = vmul.f32 %v160, %v272
    %v562 = vmul.f32 %v161, %v273
    %v563 = vmul.f32 %v162, %v274
    %v564 = vmul.f32 %v163, %v275
    %v565 = vmul.f32 %v164, %v276
    %v566 = vsel %vm68, %v550, 0.0
    %567 = vadd.xlane.f32.xlu0 %v566
    %v568 = vpop.xlane.xlu0 %567
    %v569 = vsel %vm68, %v551, 0.0
    %570 = vadd.xlane.f32.xlu0 %v569
    %v571 = vpop.xlane.xlu0 %570
    %v572 = vsel %vm68, %v552, 0.0
    %573 = vadd.xlane.f32.xlu0 %v572
    %v574 = vpop.xlane.xlu0 %573
    %v575 = vsel %vm68, %v553, 0.0
    %576 = vadd.xlane.f32.xlu0 %v575
    %v577 = vpop.xlane.xlu0 %576
    %v578 = vsel %vm68, %v554, 0.0
    %579 = vadd.xlane.f32.xlu0 %v578
    %v580 = vpop.xlane.xlu0 %579
    %v581 = vsel %vm68, %v555, 0.0
    %582 = vadd.xlane.f32.xlu0 %v581
    %v583 = vpop.xlane.xlu0 %582
    %v584 = vsel %vm68, %v556, 0.0
    %585 = vadd.xlane.f32.xlu0 %v584
    %v586 = vpop.xlane.xlu0 %585
    %v587 = vsel %vm68, %v557, 0.0
    %588 = vadd.xlane.f32.xlu0 %v587
    %v589 = vpop.xlane.xlu0 %588
    %v590 = vsel %vm68, %v558, 0.0
    %591 = vadd.xlane.f32.xlu0 %v590
    %v592 = vpop.xlane.xlu0 %591
    %v593 = vsel %vm68, %v559, 0.0
    %594 = vadd.xlane.f32.xlu0 %v593
    %v595 = vpop.xlane.xlu0 %594
    %v596 = vsel %vm68, %v560, 0.0
    %597 = vadd.xlane.f32.xlu0 %v596
    %v598 = vpop.xlane.xlu0 %597
    %v599 = vsel %vm68, %v561, 0.0
    %600 = vadd.xlane.f32.xlu0 %v599
    %v601 = vpop.xlane.xlu0 %600
    %v602 = vsel %vm68, %v562, 0.0
    %603 = vadd.xlane.f32.xlu0 %v602
    %v604 = vpop.xlane.xlu0 %603
    %v605 = vsel %vm68, %v563, 0.0
    %606 = vadd.xlane.f32.xlu0 %v605
    %v607 = vpop.xlane.xlu0 %606
    %v608 = vsel %vm68, %v564, 0.0
    %609 = vadd.xlane.f32.xlu0 %v608
    %v610 = vpop.xlane.xlu0 %609
    %v611 = vsel %vm68, %v565, 0.0
    %612 = vadd.xlane.f32.xlu0 %v611
    %v613 = vpop.xlane.xlu0 %612
    %v614 = vmul.f32 %v568, 10.0
    %v615 = vmul.f32 %v571, 10.0
    %v616 = vmul.f32 %v574, 10.0
    %v617 = vmul.f32 %v577, 10.0
    %v618 = vmul.f32 %v580, 10.0
    %v619 = vmul.f32 %v583, 10.0
    %v620 = vmul.f32 %v586, 10.0
    %v621 = vmul.f32 %v589, 10.0
    %v622 = vmul.f32 %v592, 10.0
    %v623 = vmul.f32 %v595, 10.0
    %v624 = vmul.f32 %v598, 10.0
    %v625 = vmul.f32 %v601, 10.0
    %v626 = vmul.f32 %v604, 10.0
    %v627 = vmul.f32 %v607, 10.0
    %v628 = vmul.f32 %v610, 10.0
    %v629 = vmul.f32 %v613, 10.0
    %v630 = vld [vmem:[%s2] sm:$0xff]
    %v631 = vld [vmem:[%s2 + $0x8] sm:$0xff]
    %v632 = vld [vmem:[%s2 + $0x10] sm:$0xff]
    %v633 = vld [vmem:[%s2 + $0x18] sm:$0xff]
    %vm634 = vnez %v630
    %vm635 = vnez %v631
    %vm636 = vnez %v632
    %vm637 = vnez %v633
    %v638 = vmul.f32 %v534, 1.442695
    %v639 = vpow.pop %v638
    %v640 = vmul.f32 %v535, 1.442695
    %v641 = vpow.pop %v640
    %v642 = vmul.f32 %v536, 1.442695
    %v643 = vpow.pop %v642
    %v644 = vmul.f32 %v537, 1.442695
    %v645 = vpow.pop %v644
    %v646 = vmul.f32 %v538, 1.442695
    %v647 = vpow.pop %v646
    %v648 = vmul.f32 %v539, 1.442695
    %v649 = vpow.pop %v648
    %v650 = vmul.f32 %v540, 1.442695
    %v651 = vpow.pop %v650
    %v652 = vmul.f32 %v541, 1.442695
    %v653 = vpow.pop %v652
    %v654 = vmul.f32 %v542, 1.442695
    %v655 = vpow.pop %v654
    %v656 = vmul.f32 %v543, 1.442695
    %v657 = vpow.pop %v656
    %v658 = vmul.f32 %v544, 1.442695
    %v659 = vpow.pop %v658
    %v660 = vmul.f32 %v545, 1.442695
    %v661 = vpow.pop %v660
    %v662 = vmul.f32 %v546, 1.442695
    %v663 = vpow.pop %v662
    %v664 = vmul.f32 %v547, 1.442695
    %v665 = vpow.pop %v664
    %v666 = vmul.f32 %v548, 1.442695
    %v667 = vpow.pop %v666
    %v668 = vmul.f32 %v549, 1.442695
    %v669 = vpow.pop %v668
    %670 = vxpose.xlu0.b32.start [1/16] %v639, 128
    %671 = vxpose.xlu0.b32.cont [2/16] %v641, 128
    %672 = vxpose.xlu0.b32.cont [3/16] %v643, 128
    %673 = vxpose.xlu0.b32.cont [4/16] %v645, 128
    %674 = vxpose.xlu0.b32.cont [5/16] %v647, 128
    %675 = vxpose.xlu0.b32.cont [6/16] %v649, 128
    %676 = vxpose.xlu0.b32.cont [7/16] %v651, 128
    %677 = vxpose.xlu0.b32.cont [8/16] %v653, 128
    %678 = vxpose.xlu0.b32.cont [9/16] %v655, 128
    %679 = vxpose.xlu0.b32.cont [10/16] %v657, 128
    %680 = vxpose.xlu0.b32.cont [11/16] %v659, 128
    %681 = vxpose.xlu0.b32.cont [12/16] %v661, 128
    %682 = vxpose.xlu0.b32.cont [13/16] %v663, 128
    %683 = vxpose.xlu0.b32.cont [14/16] %v665, 128
    %684 = vxpose.xlu0.b32.cont [15/16] %v667, 128
    %685 = vxpose.xlu0.b32.end [16/16] %v669, 128
    %v686 = vpop.trf.xlu0
    %v687 = vpop.trf.xlu0
    %v688 = vpop.trf.xlu0
    %v689 = vpop.trf.xlu0
    %v690 = vpop.trf.xlu0
    %v691 = vpop.trf.xlu0
    %v692 = vpop.trf.xlu0
    %v693 = vpop.trf.xlu0
    %v694 = vpop.trf.xlu0
    %v695 = vpop.trf.xlu0
    %v696 = vpop.trf.xlu0
    %v697 = vpop.trf.xlu0
    %v698 = vpop.trf.xlu0
    %v699 = vpop.trf.xlu0
    %v700 = vpop.trf.xlu0
    %v701 = vpop.trf.xlu0
    %v702 = vsel %vm634, 16843009, 0
    %v703 = vsel %vm635, 16843009, 0
    %v704 = vsel %vm636, 16843009, 0
    %v705 = vsel %vm637, 16843009, 0
    %v706 = vunpack.c.0.s8 %v702
    %v707 = vunpack.c.1.s8 %v702
    %v708 = vunpack.c.2.s8 %v702
    %v709 = vunpack.c.3.s8 %v702
    %v710 = vunpack.c.0.s8 %v703
    %v711 = vunpack.c.1.s8 %v703
    %v712 = vunpack.c.2.s8 %v703
    %v713 = vunpack.c.3.s8 %v703
    %v714 = vunpack.c.0.s8 %v704
    %v715 = vunpack.c.1.s8 %v704
    %v716 = vunpack.c.2.s8 %v704
    %v717 = vunpack.c.3.s8 %v704
    %v718 = vunpack.c.0.s8 %v705
    %v719 = vunpack.c.1.s8 %v705
    %v720 = vunpack.c.2.s8 %v705
    %v721 = vunpack.c.3.s8 %v705
    %v722 = vpack.c.b16 %v706, %v706
    %v723 = vpack.c.b8 %v722, %v722
    %v724 = vpack.c.b16 %v707, %v707
    %v725 = vpack.c.b8 %v724, %v724
    %v726 = vpack.c.b16 %v708, %v708
    %v727 = vpack.c.b8 %v726, %v726
    %v728 = vpack.c.b16 %v709, %v709
    %v729 = vpack.c.b8 %v728, %v728
    %v730 = vpack.c.b16 %v710, %v710
    %v731 = vpack.c.b8 %v730, %v730
    %v732 = vpack.c.b16 %v711, %v711
    %v733 = vpack.c.b8 %v732, %v732
    %v734 = vpack.c.b16 %v712, %v712
    %v735 = vpack.c.b8 %v734, %v734
    %v736 = vpack.c.b16 %v713, %v713
    %v737 = vpack.c.b8 %v736, %v736
    %v738 = vpack.c.b16 %v714, %v714
    %v739 = vpack.c.b8 %v738, %v738
    %v740 = vpack.c.b16 %v715, %v715
    %v741 = vpack.c.b8 %v740, %v740
    %v742 = vpack.c.b16 %v716, %v716
    %v743 = vpack.c.b8 %v742, %v742
    %v744 = vpack.c.b16 %v717, %v717
    %v745 = vpack.c.b8 %v744, %v744
    %v746 = vpack.c.b16 %v718, %v718
    %v747 = vpack.c.b8 %v746, %v746
    %v748 = vpack.c.b16 %v719, %v719
    %v749 = vpack.c.b8 %v748, %v748
    %v750 = vpack.c.b16 %v720, %v720
    %v751 = vpack.c.b8 %v750, %v750
    %v752 = vpack.c.b16 %v721, %v721
    %v753 = vpack.c.b8 %v752, %v752
    %vm754 = vnez %v723
    %vm755 = vnez %v725
    %vm756 = vnez %v727
    %vm757 = vnez %v729
    %vm758 = vnez %v731
    %vm759 = vnez %v733
    %vm760 = vnez %v735
    %vm761 = vnez %v737
    %vm762 = vnez %v739
    %vm763 = vnez %v741
    %vm764 = vnez %v743
    %vm765 = vnez %v745
    %vm766 = vnez %v747
    %vm767 = vnez %v749
    %vm768 = vnez %v751
    %vm769 = vnez %v753
    %v770 = vsel %vm754, 16843009, 0
    %v771 = vsel %vm755, 16843009, 0
    %v772 = vsel %vm756, 16843009, 0
    %v773 = vsel %vm757, 16843009, 0
    %v774 = vsel %vm758, 16843009, 0
    %v775 = vsel %vm759, 16843009, 0
    %v776 = vsel %vm760, 16843009, 0
    %v777 = vsel %vm761, 16843009, 0
    %v778 = vsel %vm762, 16843009, 0
    %v779 = vsel %vm763, 16843009, 0
    %v780 = vsel %vm764, 16843009, 0
    %v781 = vsel %vm765, 16843009, 0
    %v782 = vsel %vm766, 16843009, 0
    %v783 = vsel %vm767, 16843009, 0
    %v784 = vsel %vm768, 16843009, 0
    %v785 = vsel %vm769, 16843009, 0
    %v786 = vunpack.c.0.s8 %v770
    %v787 = vunpack.c.0.s8 %v771
    %v788 = vunpack.c.0.s8 %v772
    %v789 = vunpack.c.0.s8 %v773
    %v790 = vunpack.c.0.s8 %v774
    %v791 = vunpack.c.0.s8 %v775
    %v792 = vunpack.c.0.s8 %v776
    %v793 = vunpack.c.0.s8 %v777
    %v794 = vunpack.c.0.s8 %v778
    %v795 = vunpack.c.0.s8 %v779
    %v796 = vunpack.c.0.s8 %v780
    %v797 = vunpack.c.0.s8 %v781
    %v798 = vunpack.c.0.s8 %v782
    %v799 = vunpack.c.0.s8 %v783
    %v800 = vunpack.c.0.s8 %v784
    %v801 = vunpack.c.0.s8 %v785
    %vm802 = vcmp.ne.s32.totalorder %v786, 0
    %vm803 = vcmp.ne.s32.totalorder %v787, 0
    %vm804 = vcmp.ne.s32.totalorder %v788, 0
    %vm805 = vcmp.ne.s32.totalorder %v789, 0
    %vm806 = vcmp.ne.s32.totalorder %v790, 0
    %vm807 = vcmp.ne.s32.totalorder %v791, 0
    %vm808 = vcmp.ne.s32.totalorder %v792, 0
    %vm809 = vcmp.ne.s32.totalorder %v793, 0
    %vm810 = vcmp.ne.s32.totalorder %v794, 0
    %vm811 = vcmp.ne.s32.totalorder %v795, 0
    %vm812 = vcmp.ne.s32.totalorder %v796, 0
    %vm813 = vcmp.ne.s32.totalorder %v797, 0
    %vm814 = vcmp.ne.s32.totalorder %v798, 0
    %vm815 = vcmp.ne.s32.totalorder %v799, 0
    %vm816 = vcmp.ne.s32.totalorder %v800, 0
    %vm817 = vcmp.ne.s32.totalorder %v801, 0
    %v818 = vsel %vm802, %v639, 0.0
    %v819 = vsel %vm803, %v641, 0.0
    %v820 = vsel %vm804, %v643, 0.0
    %v821 = vsel %vm805, %v645, 0.0
    %v822 = vsel %vm806, %v647, 0.0
    %v823 = vsel %vm807, %v649, 0.0
    %v824 = vsel %vm808, %v651, 0.0
    %v825 = vsel %vm809, %v653, 0.0
    %v826 = vsel %vm810, %v655, 0.0
    %v827 = vsel %vm811, %v657, 0.0
    %v828 = vsel %vm812, %v659, 0.0
    %v829 = vsel %vm813, %v661, 0.0
    %v830 = vsel %vm814, %v663, 0.0
    %v831 = vsel %vm815, %v665, 0.0
    %v832 = vsel %vm816, %v667, 0.0
    %v833 = vsel %vm817, %v669, 0.0
    %834 = vadd.xlane.f32.xlu0 %v818
    %v835 = vpop.xlane.xlu0 %834
    %836 = vadd.xlane.f32.xlu0 %v819
    %v837 = vpop.xlane.xlu0 %836
    %838 = vadd.xlane.f32.xlu0 %v820
    %v839 = vpop.xlane.xlu0 %838
    %840 = vadd.xlane.f32.xlu0 %v821
    %v841 = vpop.xlane.xlu0 %840
    %842 = vadd.xlane.f32.xlu0 %v822
    %v843 = vpop.xlane.xlu0 %842
    %844 = vadd.xlane.f32.xlu0 %v823
    %v845 = vpop.xlane.xlu0 %844
    %846 = vadd.xlane.f32.xlu0 %v824
    %v847 = vpop.xlane.xlu0 %846
    %848 = vadd.xlane.f32.xlu0 %v825
    %v849 = vpop.xlane.xlu0 %848
    %850 = vadd.xlane.f32.xlu0 %v826
    %v851 = vpop.xlane.xlu0 %850
    %852 = vadd.xlane.f32.xlu0 %v827
    %v853 = vpop.xlane.xlu0 %852
    %854 = vadd.xlane.f32.xlu0 %v828
    %v855 = vpop.xlane.xlu0 %854
    %856 = vadd.xlane.f32.xlu0 %v829
    %v857 = vpop.xlane.xlu0 %856
    %858 = vadd.xlane.f32.xlu0 %v830
    %v859 = vpop.xlane.xlu0 %858
    %860 = vadd.xlane.f32.xlu0 %v831
    %v861 = vpop.xlane.xlu0 %860
    %862 = vadd.xlane.f32.xlu0 %v832
    %v863 = vpop.xlane.xlu0 %862
    %864 = vadd.xlane.f32.xlu0 %v833
    %v865 = vpop.xlane.xlu0 %864
    %v866 = vsel %vm802, %v686, 0.0
    %v867 = vsel %vm803, %v687, 0.0
    %v868 = vsel %vm804, %v688, 0.0
    %v869 = vsel %vm805, %v689, 0.0
    %v870 = vsel %vm806, %v690, 0.0
    %v871 = vsel %vm807, %v691, 0.0
    %v872 = vsel %vm808, %v692, 0.0
    %v873 = vsel %vm809, %v693, 0.0
    %v874 = vsel %vm810, %v694, 0.0
    %v875 = vsel %vm811, %v695, 0.0
    %v876 = vsel %vm812, %v696, 0.0
    %v877 = vsel %vm813, %v697, 0.0
    %v878 = vsel %vm814, %v698, 0.0
    %v879 = vsel %vm815, %v699, 0.0
    %v880 = vsel %vm816, %v700, 0.0
    %v881 = vsel %vm817, %v701, 0.0
    %882 = vadd.xlane.f32.xlu0 %v866
    %v883 = vpop.xlane.xlu0 %882
    %884 = vadd.xlane.f32.xlu0 %v867
    %v885 = vpop.xlane.xlu0 %884
    %886 = vadd.xlane.f32.xlu0 %v868
    %v887 = vpop.xlane.xlu0 %886
    %888 = vadd.xlane.f32.xlu0 %v869
    %v889 = vpop.xlane.xlu0 %888
    %890 = vadd.xlane.f32.xlu0 %v870
    %v891 = vpop.xlane.xlu0 %890
    %892 = vadd.xlane.f32.xlu0 %v871
    %v893 = vpop.xlane.xlu0 %892
    %894 = vadd.xlane.f32.xlu0 %v872
    %v895 = vpop.xlane.xlu0 %894
    %896 = vadd.xlane.f32.xlu0 %v873
    %v897 = vpop.xlane.xlu0 %896
    %898 = vadd.xlane.f32.xlu0 %v874
    %v899 = vpop.xlane.xlu0 %898
    %900 = vadd.xlane.f32.xlu0 %v875
    %v901 = vpop.xlane.xlu0 %900
    %902 = vadd.xlane.f32.xlu0 %v876
    %v903 = vpop.xlane.xlu0 %902
    %904 = vadd.xlane.f32.xlu0 %v877
    %v905 = vpop.xlane.xlu0 %904
    %906 = vadd.xlane.f32.xlu0 %v878
    %v907 = vpop.xlane.xlu0 %906
    %908 = vadd.xlane.f32.xlu0 %v879
    %v909 = vpop.xlane.xlu0 %908
    %910 = vadd.xlane.f32.xlu0 %v880
    %v911 = vpop.xlane.xlu0 %910
    %912 = vadd.xlane.f32.xlu0 %v881
    %v913 = vpop.xlane.xlu0 %912
    %v914 = vmul.f32 %v614, 2.0
    %v915 = vmul.f32 %v615, 2.0
    %v916 = vmul.f32 %v616, 2.0
    %v917 = vmul.f32 %v617, 2.0
    %v918 = vmul.f32 %v618, 2.0
    %v919 = vmul.f32 %v619, 2.0
    %v920 = vmul.f32 %v620, 2.0
    %v921 = vmul.f32 %v621, 2.0
    %v922 = vmul.f32 %v622, 2.0
    %v923 = vmul.f32 %v623, 2.0
    %v924 = vmul.f32 %v624, 2.0
    %v925 = vmul.f32 %v625, 2.0
    %v926 = vmul.f32 %v626, 2.0
    %v927 = vmul.f32 %v627, 2.0
    %v928 = vmul.f32 %v628, 2.0
    %v929 = vmul.f32 %v629, 2.0
    %v930 = vlog2.pop %v835
    %v931 = vmul.f32 %v930, 0.6931472
    %v932 = vlog2.pop %v837
    %v933 = vmul.f32 %v932, 0.6931472
    %v934 = vlog2.pop %v839
    %v935 = vmul.f32 %v934, 0.6931472
    %v936 = vlog2.pop %v841
    %v937 = vmul.f32 %v936, 0.6931472
    %v938 = vlog2.pop %v843
    %v939 = vmul.f32 %v938, 0.6931472
    %v940 = vlog2.pop %v845
    %v941 = vmul.f32 %v940, 0.6931472
    %v942 = vlog2.pop %v847
    %v943 = vmul.f32 %v942, 0.6931472
    %v944 = vlog2.pop %v849
    %v945 = vmul.f32 %v944, 0.6931472
    %v946 = vlog2.pop %v851
    %v947 = vmul.f32 %v946, 0.6931472
    %v948 = vlog2.pop %v853
    %v949 = vmul.f32 %v948, 0.6931472
    %v950 = vlog2.pop %v855
    %v951 = vmul.f32 %v950, 0.6931472
    %v952 = vlog2.pop %v857
    %v953 = vmul.f32 %v952, 0.6931472
    %v954 = vlog2.pop %v859
    %v955 = vmul.f32 %v954, 0.6931472
    %v956 = vlog2.pop %v861
    %v957 = vmul.f32 %v956, 0.6931472
    %v958 = vlog2.pop %v863
    %v959 = vmul.f32 %v958, 0.6931472
    %v960 = vlog2.pop %v865
    %v961 = vmul.f32 %v960, 0.6931472
    %v962 = vsub.f32 %v914, %v931
    %v963 = vsub.f32 %v915, %v933
    %v964 = vsub.f32 %v916, %v935
    %v965 = vsub.f32 %v917, %v937
    %v966 = vsub.f32 %v918, %v939
    %v967 = vsub.f32 %v919, %v941
    %v968 = vsub.f32 %v920, %v943
    %v969 = vsub.f32 %v921, %v945
    %v970 = vsub.f32 %v922, %v947
    %v971 = vsub.f32 %v923, %v949
    %v972 = vsub.f32 %v924, %v951
    %v973 = vsub.f32 %v925, %v953
    %v974 = vsub.f32 %v926, %v955
    %v975 = vsub.f32 %v927, %v957
    %v976 = vsub.f32 %v928, %v959
    %v977 = vsub.f32 %v929, %v961
    %v978 = vlog2.pop %v883
    %v979 = vmul.f32 %v978, 0.6931472
    %v980 = vlog2.pop %v885
    %v981 = vmul.f32 %v980, 0.6931472
    %v982 = vlog2.pop %v887
    %v983 = vmul.f32 %v982, 0.6931472
    %v984 = vlog2.pop %v889
    %v985 = vmul.f32 %v984, 0.6931472
    %v986 = vlog2.pop %v891
    %v987 = vmul.f32 %v986, 0.6931472
    %v988 = vlog2.pop %v893
    %v989 = vmul.f32 %v988, 0.6931472
    %v990 = vlog2.pop %v895
    %v991 = vmul.f32 %v990, 0.6931472
    %v992 = vlog2.pop %v897
    %v993 = vmul.f32 %v992, 0.6931472
    %v994 = vlog2.pop %v899
    %v995 = vmul.f32 %v994, 0.6931472
    %v996 = vlog2.pop %v901
    %v997 = vmul.f32 %v996, 0.6931472
    %v998 = vlog2.pop %v903
    %v999 = vmul.f32 %v998, 0.6931472
    %v1000 = vlog2.pop %v905
    %v1001 = vmul.f32 %v1000, 0.6931472
    %v1002 = vlog2.pop %v907
    %v1003 = vmul.f32 %v1002, 0.6931472
    %v1004 = vlog2.pop %v909
    %v1005 = vmul.f32 %v1004, 0.6931472
    %v1006 = vlog2.pop %v911
    %v1007 = vmul.f32 %v1006, 0.6931472
    %v1008 = vlog2.pop %v913
    %v1009 = vmul.f32 %v1008, 0.6931472
    %v1010 = vsub.f32 %v962, %v979
    %v1011 = vsub.f32 %v963, %v981
    %v1012 = vsub.f32 %v964, %v983
    %v1013 = vsub.f32 %v965, %v985
    %v1014 = vsub.f32 %v966, %v987
    %v1015 = vsub.f32 %v967, %v989
    %v1016 = vsub.f32 %v968, %v991
    %v1017 = vsub.f32 %v969, %v993
    %v1018 = vsub.f32 %v970, %v995
    %v1019 = vsub.f32 %v971, %v997
    %v1020 = vsub.f32 %v972, %v999
    %v1021 = vsub.f32 %v973, %v1001
    %v1022 = vsub.f32 %v974, %v1003
    %v1023 = vsub.f32 %v975, %v1005
    %v1024 = vsub.f32 %v976, %v1007
    %v1025 = vsub.f32 %v977, %v1009
    %vm1026 = vcmask 7168
    %v1027 = vsel %vm1026, %v1010, 0.0
    %v1028 = vsel %vm1026, %v1011, 0.0
    %v1029 = vadd.f32 %v1027, %v1028
    %v1030 = vsel %vm1026, %v1012, 0.0
    %v1031 = vadd.f32 %v1029, %v1030
    %v1032 = vsel %vm1026, %v1013, 0.0
    %v1033 = vadd.f32 %v1031, %v1032
    %v1034 = vsel %vm1026, %v1014, 0.0
    %v1035 = vadd.f32 %v1033, %v1034
    %v1036 = vsel %vm1026, %v1015, 0.0
    %v1037 = vadd.f32 %v1035, %v1036
    %v1038 = vsel %vm1026, %v1016, 0.0
    %v1039 = vadd.f32 %v1037, %v1038
    %v1040 = vsel %vm1026, %v1017, 0.0
    %v1041 = vadd.f32 %v1039, %v1040
    %v1042 = vsel %vm1026, %v1018, 0.0
    %v1043 = vadd.f32 %v1041, %v1042
    %v1044 = vsel %vm1026, %v1019, 0.0
    %v1045 = vadd.f32 %v1043, %v1044
    %v1046 = vsel %vm1026, %v1020, 0.0
    %v1047 = vadd.f32 %v1045, %v1046
    %v1048 = vsel %vm1026, %v1021, 0.0
    %v1049 = vadd.f32 %v1047, %v1048
    %v1050 = vsel %vm1026, %v1022, 0.0
    %v1051 = vadd.f32 %v1049, %v1050
    %v1052 = vsel %vm1026, %v1023, 0.0
    %v1053 = vadd.f32 %v1051, %v1052
    %v1054 = vsel %vm1026, %v1024, 0.0
    %v1055 = vadd.f32 %v1053, %v1054
    %v1056 = vsel %vm1026, %v1025, 0.0
    %v1057 = vadd.f32 %v1055, %v1056
    %1058 = vadd.xlane.f32.xlu0 %v1057
    %v1059 = vpop.xlane.xlu0 %1058
    %v1060 = vrot.slane %v1059, 4
    %v1061 = vadd.f32 %v1059, %v1060
    %v1062 = vrot.slane %v1061, 2
    %v1063 = vadd.f32 %v1061, %v1062
    %v1064 = vrot.slane %v1063, 1
    %v1065 = vadd.f32 %v1063, %v1064
    %s1066 = vtos %v1065
    %s1067 = ssub.f32 0.0, %s1066
    %v1068 = vrcp.pop 16.0
    %s1069 = vtos %v1068
    %s1070 = smul.f32 %s1067, %s1069
    %s1071 = scalar_lea.smem [#allocation2], 0
    %1072 = sst [smem:[%s1071]] %s1070
    // Predicated region
    $region14: #{tpu_custom_call.1} parent=1 // pred_check
      _
    $region15: #{tpu_custom_call.1} parent=1 // pred_check_branch
      %1074 = sbr.rel (0) target = $region17
    $region16: #{tpu_custom_call.1} parent=1 // pred_region
      %s1076 = ssub.s32 16, 16
      %1077 = vsyncadd [#allocation4], %s1076
      %1080 = dma.smem_to_hbm [#allocation2], 16, %s3, [#allocation4]
    $region17: #{tpu_custom_call.1} parent=1 // pred_fallthru
      _
    // Predicated region
    $region18: #{tpu_custom_call.1} parent=1 // pred_check
      _
    $region19: #{tpu_custom_call.1} parent=1 // pred_check_branch
      %1082 = sbr.rel (0) target = $region21
    $region20: #{tpu_custom_call.1} parent=1 // pred_region
      %s1084 = ssub.s32 2048, 2048
      %1085 = vsyncadd [#allocation3], %s1084
      %s1086 = sshll.u32 [#allocation5], 4
      %s1087 = int_to_ptr.vmem [resolvable:$true] %s1086
      %1092 = dma.vmem_to_hbm [thread:$0]  %s1087, 2048, %s4, [#allocation3], 128, 128, 8
    $region21: #{tpu_custom_call.1} parent=1 // pred_fallthru
      _
    // Predicated region
    $region22: #{tpu_custom_call.1} parent=1 // pred_check
      _
    $region23: #{tpu_custom_call.1} parent=1 // pred_check_branch
      %1094 = sbr.rel (0) target = $region25
    $region24: #{tpu_custom_call.1} parent=1 // pred_region
      %1095 = dma.done [#allocation4], 16
    $region25: #{tpu_custom_call.1} parent=1 // pred_fallthru
      _
    // Predicated region
    $region26: #{tpu_custom_call.1} parent=1 // pred_check
      _
    $region27: #{tpu_custom_call.1} parent=1 // pred_check_branch
      %1097 = sbr.rel (0) target = $region29
    $region28: #{tpu_custom_call.1} parent=1 // pred_region
      %1098 = dma.done [#allocation3], 2048
    $region29: #{tpu_custom_call.1} parent=1 // pred_fallthru
      _
    %1099 = sfence
    %1100 = vsyncpa [#allocation3], 1
    %1101 = vsyncpa [#allocation4], 1

</llo_original>
